<compile_context>
chip_gen: v7x
topology: tpu7x:2x2x1
jax: 0.10.0
libtpu: 0.0.40
codegen_flags: <defaults>
</compile_context>

<pallas_src>
import functools

import jax
import jax.numpy as jnp
from jax.experimental import pallas as pl
from jax.experimental.pallas import tpu as pltpu

NUM_BINARY = 3
NUM_CLASSES = NUM_BINARY + 1   # 4
EPS = 1e-5
LANE = 128
MAX_TILE = 32768               # f32 lanes per step (review: 32K-64K)


def _round_up(x, m):
    return ((x + m - 1) // m) * m


def _dice_kernel(pred_ref, target_ref, num_ref, den_ref, bce_ref,
                 *, hw, tile, tiles_per_half, need_mask):
    # grid = (B, nhalf, tiles_per_half); axis 2 is the HW reduction (innermost, arbitrary).
    t_idx = pl.program_id(2)

    @pl.when(t_idx == 0)
    def _init():
        num_ref[...] = jnp.zeros_like(num_ref)
        den_ref[...] = jnp.zeros_like(den_ref)
        bce_ref[...] = jnp.zeros_like(bce_ref)

    pred = pred_ref[0].astype(jnp.float32)      # (NUM_CLASSES, tile)
    tgt = target_ref[0].astype(jnp.float32)     # (NUM_BINARY, tile)

    # ---- one-hot organ target (background -> class 0, channel k -> class k+1) ----
    t0 = tgt[0:1, :]
    t1 = tgt[1:2, :]
    t2 = tgt[2:3, :]
    bg = (t0 + t1 + t2) == 0.0                  # exact, matches target.sum(dim=1)==0
    m1 = t1 > t0                                # strict > -> first-max tie-break (== torch.argmax)
    m2 = t2 > jnp.maximum(t0, t1)
    cls = jnp.where(bg, 0, jnp.where(m2, 3, jnp.where(m1, 2, 1)))        # (1, tile) int32
    class_iota = jax.lax.broadcasted_iota(jnp.int32, (NUM_CLASSES, tile), 0)
    mask = class_iota == cls                                             # (4, tile) bool
    oh = mask.astype(jnp.float32)

    # ---- per-tile contributions (one-hot is binary -> sum(oh^2) == sum(oh)) ----
    num_c = pred * oh                            # dice numerator terms
    den_c = pred * pred + oh                     # merged denominator terms
    # single-log BCE (t in {0,1}): clamp(log(t ? p : 1-p), -100); negation applied in wrapper
    bce_c = jnp.maximum(jnp.log(jnp.where(mask, pred, 1.0 - pred)), -100.0)

    if need_mask:
        # Padded / duplicated boundary tiles: zero out-of-range lanes (select, NaN-safe).
        start = (pl.program_id(1) * tiles_per_half + t_idx) * tile
        lane = jax.lax.broadcasted_iota(jnp.int32, (1, tile), 1)
        valid = (start + lane) < hw
        num_c = jnp.where(valid, num_c, 0.0)
        den_c = jnp.where(valid, den_c, 0.0)
        bce_c = jnp.where(valid, bce_c, 0.0)

    num_ref[...] += jnp.sum(num_c, axis=1, keepdims=True).reshape(num_ref.shape)
    den_ref[...] += jnp.sum(den_c, axis=1, keepdims=True).reshape(den_ref.shape)
    bce_ref[...] += jnp.sum(bce_c, axis=1, keepdims=True).reshape(bce_ref.shape)


def dice_loss(pred, target, *, max_tile=MAX_TILE):
    """pred (B, 4, H, W), target (B, 3, H, W) -> per-sample loss (B,)."""
    B, C, H, W = pred.shape
    assert C == NUM_CLASSES and target.shape[1] == NUM_BINARY
    HW = H * W

    # Tile is always a multiple of 128 (lane-aligned); boundary handled by in-kernel mask.
    tile = min(max_tile, _round_up(HW, LANE))
    tile = max(LANE, (tile // LANE) * LANE)
    num_tiles = pl.cdiv(HW, tile)

    # Split the HW reduction into two "parallel" halves so v7x's second TensorCore has
    # work even when B is small (harmless on single-TC v5e/v6e).
    if num_tiles >= 2:
        nhalf = 2
        tiles_per_half = pl.cdiv(num_tiles, 2)
    else:
        nhalf = 1
        tiles_per_half = num_tiles
    padded_hw = nhalf * tiles_per_half * tile
    need_mask = padded_hw != HW
    clamp_blocks = (nhalf * tiles_per_half) != num_tiles
    last_blk = num_tiles - 1

    pred3 = pred.reshape(B, NUM_CLASSES, HW)     # native dtype; cast per tile in-kernel
    tgt3 = target.reshape(B, NUM_BINARY, HW)     # (caller may pass int8/bool target)

    def in_map(b, h, t):
        blk = h * tiles_per_half + t
        if clamp_blocks:   # odd tile count: duplicate tail blocks are fully masked in-kernel
            blk = jnp.minimum(blk, last_blk)
        return (b, 0, blk)

    out_map = lambda b, h, t: (b, h, 0, 0)
    out_sds = jax.ShapeDtypeStruct((B, nhalf, NUM_CLASSES, 1), jnp.float32)

    kernel = functools.partial(_dice_kernel, hw=HW, tile=tile,
                               tiles_per_half=tiles_per_half, need_mask=need_mask)

    num_o, den_o, bce_o = pl.pallas_call(
        kernel,
        out_shape=(out_sds, out_sds, out_sds),
        grid_spec=pltpu.PrefetchScalarGridSpec(
            num_scalar_prefetch=0,
            grid=(B, nhalf, tiles_per_half),
            in_specs=[
                pl.BlockSpec((1, NUM_CLASSES, tile), in_map),
                pl.BlockSpec((1, NUM_BINARY, tile), in_map),
            ],
            out_specs=(
                pl.BlockSpec((1, 1, NUM_CLASSES, 1), out_map),
                pl.BlockSpec((1, 1, NUM_CLASSES, 1), out_map),
                pl.BlockSpec((1, 1, NUM_CLASSES, 1), out_map),
            )),
        compiler_params=pltpu.CompilerParams(
            dimension_semantics=("parallel", "parallel", "arbitrary")),
    )(pred3, tgt3)

    # ---- O(B) finalize in the wrapper ----
    num = jnp.sum(num_o[..., 0], axis=1)                      # (B, 4)
    den = jnp.sum(den_o[..., 0], axis=1)                      # (B, 4) = sum(p^2) + sum(oh)
    dice = jnp.sum(2.0 * num / (den + EPS), axis=1)           # (B,)

    bce_mean = -jnp.sum(bce_o) / (B * NUM_CLASSES * HW)       # negate the clamped-log sum
    pt = jnp.exp(-bce_mean)
    f_loss = (1.0 - pt) ** 2 * bce_mean                       # torch.mean of a scalar is itself
    return 1.0 - dice / NUM_CLASSES + f_loss


# ---------------- pure-JAX reference (mirrors the PyTorch DiceLoss_deep) ----------------
def dice_loss_ref(pred, target):
    organ_target = jnp.argmax(target, axis=1)
    bg = jnp.sum(target, axis=1) == 0
    organ_target = jnp.where(bg, 3, organ_target)
    organ_target = organ_target + 1
    organ_target = jnp.where(organ_target == 4, 0, organ_target)
    oh = jax.nn.one_hot(organ_target, NUM_CLASSES, axis=1).astype(jnp.float32)

    dice = 0.0
    for c in range(NUM_CLASSES):
        p = pred[:, c]
        t = oh[:, c]
        dice = dice + 2.0 * jnp.sum(p * t, axis=(1, 2)) / (
            jnp.sum(p * p, axis=(1, 2)) + jnp.sum(t * t, axis=(1, 2)) + EPS)

    bce = -(oh * jnp.maximum(jnp.log(pred), -100.0)
            + (1.0 - oh) * jnp.maximum(jnp.log(1.0 - pred), -100.0))
    bce_mean = jnp.mean(bce)
    f_loss = (1.0 - jnp.exp(-bce_mean)) ** 2 * bce_mean
    return 1.0 - dice / NUM_CLASSES + f_loss


if __name__ == "__main__":
    B, H, W = 2, 16, 16
    key = jax.random.PRNGKey(0)
    k1, k2 = jax.random.split(key)

    pred = jax.nn.softmax(
        jax.random.normal(k1, (B, NUM_CLASSES, H, W), jnp.float32), axis=1)
    labels = jax.random.randint(k2, (B, H, W), 0, 4)              # label 3 == background
    target = jax.nn.one_hot(labels, 4, axis=1)[:, :NUM_BINARY].astype(jnp.float32)

    out = jax.block_until_ready(dice_loss(pred, target))
    ref = jax.block_until_ready(dice_loss_ref(pred, target))

    assert out.shape == (B,)
    assert jnp.allclose(out, ref, rtol=1e-4, atol=1e-4), (out, ref)
    print("KERNEL_OK")
</pallas_src>

<mosaic_0001>
module attributes {stable_mosaic.version = 11 : i64} {
  func.func @_dice_kernel(%arg0: i32, %arg1: i32, %arg2: i32, %arg3: memref<1x4x256xf32, #tpu.memory_space<vmem>>, %arg4: memref<1x3x256xf32, #tpu.memory_space<vmem>>, %arg5: memref<1x1x4x1xf32, #tpu.memory_space<vmem>>, %arg6: memref<1x1x4x1xf32, #tpu.memory_space<vmem>>, %arg7: memref<1x1x4x1xf32, #tpu.memory_space<vmem>>) attributes {dimension_semantics = [#tpu.dimension_semantics<parallel>, #tpu.dimension_semantics<parallel>, #tpu.dimension_semantics<arbitrary>], iteration_bounds = array<i64: 2, 1, 1>, scalar_prefetch = 0 : i64, scratch_operands = 0 : i64, tpu.core_type = #tpu.core_type<tc>, window_params = [{transform_indices = @transform_0, window_bounds = array<i64: 1, 4, 256>}, {transform_indices = @transform_1, window_bounds = array<i64: 1, 3, 256>}, {transform_indices = @transform_2, window_bounds = array<i64: 1, 1, 4, 1>}, {transform_indices = @transform_3, window_bounds = array<i64: 1, 1, 4, 1>}, {transform_indices = @transform_4, window_bounds = array<i64: 1, 1, 4, 1>}]} {
    %c0_i32 = arith.constant 0 : i32
    %0 = arith.cmpi eq, %arg2, %c0_i32 : i32
    %1 = arith.extui %0 : i1 to i32
    %c0_i32_0 = arith.constant 0 : i32
    %2 = arith.cmpi ne, %1, %c0_i32_0 : i32
    scf.if %2 {
      %cst_36 = arith.constant 0.000000e+00 : f32
      %56 = vector.broadcast %cst_36 : f32 to vector<1x1x4x1xf32>
      %c0_37 = arith.constant 0 : index
      %c0_38 = arith.constant 0 : index
      %c0_39 = arith.constant 0 : index
      %c0_40 = arith.constant 0 : index
      %57 = vector.load %arg5[%c0_37, %c0_38, %c0_39, %c0_40] : memref<1x1x4x1xf32, #tpu.memory_space<vmem>>, vector<1x1x4x1xf32>
      tpu.vector_store %arg5[%c0_37, %c0_38, %c0_39, %c0_40], %56 {strides = array<i32>} : memref<1x1x4x1xf32, #tpu.memory_space<vmem>>, vector<1x1x4x1xf32>,
      %cst_41 = arith.constant 0.000000e+00 : f32
      %58 = vector.broadcast %cst_41 : f32 to vector<1x1x4x1xf32>
      %c0_42 = arith.constant 0 : index
      %c0_43 = arith.constant 0 : index
      %c0_44 = arith.constant 0 : index
      %c0_45 = arith.constant 0 : index
      %59 = vector.load %arg6[%c0_42, %c0_43, %c0_44, %c0_45] : memref<1x1x4x1xf32, #tpu.memory_space<vmem>>, vector<1x1x4x1xf32>
      tpu.vector_store %arg6[%c0_42, %c0_43, %c0_44, %c0_45], %58 {strides = array<i32>} : memref<1x1x4x1xf32, #tpu.memory_space<vmem>>, vector<1x1x4x1xf32>,
      %cst_46 = arith.constant 0.000000e+00 : f32
      %60 = vector.broadcast %cst_46 : f32 to vector<1x1x4x1xf32>
      %c0_47 = arith.constant 0 : index
      %c0_48 = arith.constant 0 : index
      %c0_49 = arith.constant 0 : index
      %c0_50 = arith.constant 0 : index
      %61 = vector.load %arg7[%c0_47, %c0_48, %c0_49, %c0_50] : memref<1x1x4x1xf32, #tpu.memory_space<vmem>>, vector<1x1x4x1xf32>
      tpu.vector_store %arg7[%c0_47, %c0_48, %c0_49, %c0_50], %60 {strides = array<i32>} : memref<1x1x4x1xf32, #tpu.memory_space<vmem>>, vector<1x1x4x1xf32>,
    } else {
    }
    %c0 = arith.constant 0 : index
    %c0_1 = arith.constant 0 : index
    %c0_2 = arith.constant 0 : index
    %3 = vector.load %arg3[%c0, %c0_1, %c0_2] : memref<1x4x256xf32, #tpu.memory_space<vmem>>, vector<1x4x256xf32>
    %4 = vector.shape_cast %3 : vector<1x4x256xf32> to vector<4x256xf32>
    %c0_3 = arith.constant 0 : index
    %c0_4 = arith.constant 0 : index
    %c0_5 = arith.constant 0 : index
    %5 = vector.load %arg4[%c0_3, %c0_4, %c0_5] : memref<1x3x256xf32, #tpu.memory_space<vmem>>, vector<1x3x256xf32>
    %6 = vector.shape_cast %5 : vector<1x3x256xf32> to vector<3x256xf32>
    %7 = vector.extract_strided_slice %6 {offsets = [0, 0], sizes = [1, 256], strides = [1, 1]} : vector<3x256xf32> to vector<1x256xf32>
    %8 = vector.extract_strided_slice %6 {offsets = [1, 0], sizes = [1, 256], strides = [1, 1]} : vector<3x256xf32> to vector<1x256xf32>
    %9 = vector.extract_strided_slice %6 {offsets = [2, 0], sizes = [1, 256], strides = [1, 1]} : vector<3x256xf32> to vector<1x256xf32>
    %10 = arith.addf %7, %8 : vector<1x256xf32>
    %11 = arith.addf %10, %9 : vector<1x256xf32>
    %cst = arith.constant 0.000000e+00 : f32
    %12 = vector.broadcast %cst : f32 to vector<1x256xf32>
    %13 = arith.cmpf oeq, %11, %12 : vector<1x256xf32>
    %14 = arith.cmpf ogt, %8, %7 : vector<1x256xf32>
    %15 = arith.maximumf %7, %8 : vector<1x256xf32>
    %16 = arith.cmpf ogt, %9, %15 : vector<1x256xf32>
    %c2_i32 = arith.constant 2 : i32
    %c1_i32 = arith.constant 1 : i32
    %17 = vector.broadcast %c2_i32 : i32 to vector<1x256xi32>
    %18 = vector.broadcast %c1_i32 : i32 to vector<1x256xi32>
    %19 = arith.select %14, %17, %18 : vector<1x256xi1>, vector<1x256xi32>
    %c3_i32 = arith.constant 3 : i32
    %20 = vector.broadcast %c3_i32 : i32 to vector<1x256xi32>
    %21 = arith.select %16, %20, %19 : vector<1x256xi1>, vector<1x256xi32>
    %c0_i32_6 = arith.constant 0 : i32
    %22 = vector.broadcast %c0_i32_6 : i32 to vector<1x256xi32>
    %23 = arith.select %13, %22, %21 : vector<1x256xi1>, vector<1x256xi32>
    %24 = tpu.iota {dimensions = array<i32: 0>} : vector<4x256xi32>
    %25 = vector.broadcast %23 : vector<1x256xi32> to vector<4x256xi32>
    %26 = arith.cmpi eq, %24, %25 : vector<4x256xi32>
    %27 = arith.extui %26 : vector<4x256xi1> to vector<4x256xi32>
    %28 = arith.sitofp %27 : vector<4x256xi32> to vector<4x256xf32>
    %29 = arith.mulf %4, %28 : vector<4x256xf32>
    %30 = arith.mulf %4, %4 : vector<4x256xf32>
    %31 = arith.addf %30, %28 : vector<4x256xf32>
    %cst_7 = arith.constant 1.000000e+00 : f32
    %32 = vector.broadcast %cst_7 : f32 to vector<4x256xf32>
    %33 = arith.subf %32, %4 : vector<4x256xf32>
    %34 = arith.select %26, %4, %33 : vector<4x256xi1>, vector<4x256xf32>
    %35 = math.log %34 : vector<4x256xf32>
    %cst_8 = arith.constant -1.000000e+02 : f32
    %36 = vector.broadcast %cst_8 : f32 to vector<4x256xf32>
    %37 = arith.maximumf %35, %36 : vector<4x256xf32>
    %c0_9 = arith.constant 0 : index
    %c0_10 = arith.constant 0 : index
    %c0_11 = arith.constant 0 : index
    %c0_12 = arith.constant 0 : index
    %38 = vector.load %arg5[%c0_9, %c0_10, %c0_11, %c0_12] : memref<1x1x4x1xf32, #tpu.memory_space<vmem>>, vector<1x1x4x1xf32>
    %cst_13 = arith.constant dense<0.000000e+00> : vector<4xf32>
    %39 = vector.multi_reduction <add>, %29, %cst_13 [1] : vector<4x256xf32> to vector<4xf32>
    %40 = vector.shape_cast %39 : vector<4xf32> to vector<4x1xf32>
    %41 = vector.shape_cast %40 : vector<4x1xf32> to vector<1x1x4x1xf32>
    %42 = arith.addf %38, %41 : vector<1x1x4x1xf32>
    %c0_14 = arith.constant 0 : index
    %c0_15 = arith.constant 0 : index
    %c0_16 = arith.constant 0 : index
    %c0_17 = arith.constant 0 : index
    %43 = vector.load %arg5[%c0_14, %c0_15, %c0_16, %c0_17] : memref<1x1x4x1xf32, #tpu.memory_space<vmem>>, vector<1x1x4x1xf32>
    tpu.vector_store %arg5[%c0_14, %c0_15, %c0_16, %c0_17], %42 {strides = array<i32>} : memref<1x1x4x1xf32, #tpu.memory_space<vmem>>, vector<1x1x4x1xf32>,
    %c0_18 = arith.constant 0 : index
    %c0_19 = arith.constant 0 : index
    %c0_20 = arith.constant 0 : index
    %c0_21 = arith.constant 0 : index
    %44 = vector.load %arg6[%c0_18, %c0_19, %c0_20, %c0_21] : memref<1x1x4x1xf32, #tpu.memory_space<vmem>>, vector<1x1x4x1xf32>
    %cst_22 = arith.constant dense<0.000000e+00> : vector<4xf32>
    %45 = vector.multi_reduction <add>, %31, %cst_22 [1] : vector<4x256xf32> to vector<4xf32>
    %46 = vector.shape_cast %45 : vector<4xf32> to vector<4x1xf32>
    %47 = vector.shape_cast %46 : vector<4x1xf32> to vector<1x1x4x1xf32>
    %48 = arith.addf %44, %47 : vector<1x1x4x1xf32>
    %c0_23 = arith.constant 0 : index
    %c0_24 = arith.constant 0 : index
    %c0_25 = arith.constant 0 : index
    %c0_26 = arith.constant 0 : index
    %49 = vector.load %arg6[%c0_23, %c0_24, %c0_25, %c0_26] : memref<1x1x4x1xf32, #tpu.memory_space<vmem>>, vector<1x1x4x1xf32>
    tpu.vector_store %arg6[%c0_23, %c0_24, %c0_25, %c0_26], %48 {strides = array<i32>} : memref<1x1x4x1xf32, #tpu.memory_space<vmem>>, vector<1x1x4x1xf32>,
    %c0_27 = arith.constant 0 : index
    %c0_28 = arith.constant 0 : index
    %c0_29 = arith.constant 0 : index
    %c0_30 = arith.constant 0 : index
    %50 = vector.load %arg7[%c0_27, %c0_28, %c0_29, %c0_30] : memref<1x1x4x1xf32, #tpu.memory_space<vmem>>, vector<1x1x4x1xf32>
    %cst_31 = arith.constant dense<0.000000e+00> : vector<4xf32>
    %51 = vector.multi_reduction <add>, %37, %cst_31 [1] : vector<4x256xf32> to vector<4xf32>
    %52 = vector.shape_cast %51 : vector<4xf32> to vector<4x1xf32>
    %53 = vector.shape_cast %52 : vector<4x1xf32> to vector<1x1x4x1xf32>
    %54 = arith.addf %50, %53 : vector<1x1x4x1xf32>
    %c0_32 = arith.constant 0 : index
    %c0_33 = arith.constant 0 : index
    %c0_34 = arith.constant 0 : index
    %c0_35 = arith.constant 0 : index
    %55 = vector.load %arg7[%c0_32, %c0_33, %c0_34, %c0_35] : memref<1x1x4x1xf32, #tpu.memory_space<vmem>>, vector<1x1x4x1xf32>
    tpu.vector_store %arg7[%c0_32, %c0_33, %c0_34, %c0_35], %54 {strides = array<i32>} : memref<1x1x4x1xf32, #tpu.memory_space<vmem>>, vector<1x1x4x1xf32>,
    return
  }
  func.func @transform_0(%arg0: i32, %arg1: i32, %arg2: i32) -> (i32, i32, i32) {
    %c1_i32 = arith.constant 1 : i32
    %0 = arith.muli %arg1, %c1_i32 : i32
    %1 = arith.addi %0, %arg2 : i32
    %c0_i32 = arith.constant 0 : i32
    %c0_i32_0 = arith.constant 0 : i32
    return %arg0, %c0_i32, %1 : i32, i32, i32
  }
  func.func @transform_1(%arg0: i32, %arg1: i32, %arg2: i32) -> (i32, i32, i32) {
    %c1_i32 = arith.constant 1 : i32
    %0 = arith.muli %arg1, %c1_i32 : i32
    %1 = arith.addi %0, %arg2 : i32
    %c0_i32 = arith.constant 0 : i32
    %c0_i32_0 = arith.constant 0 : i32
    return %arg0, %c0_i32, %1 : i32, i32, i32
  }
  func.func @transform_2(%arg0: i32, %arg1: i32, %arg2: i32) -> (i32, i32, i32, i32) {
    %c0_i32 = arith.constant 0 : i32
    %c0_i32_0 = arith.constant 0 : i32
    %c0_i32_1 = arith.constant 0 : i32
    return %arg0, %arg1, %c0_i32, %c0_i32_0 : i32, i32, i32, i32
  }
  func.func @transform_3(%arg0: i32, %arg1: i32, %arg2: i32) -> (i32, i32, i32, i32) {
    %c0_i32 = arith.constant 0 : i32
    %c0_i32_0 = arith.constant 0 : i32
    %c0_i32_1 = arith.constant 0 : i32
    return %arg0, %arg1, %c0_i32, %c0_i32_0 : i32, i32, i32, i32
  }
  func.func @transform_4(%arg0: i32, %arg1: i32, %arg2: i32) -> (i32, i32, i32, i32) {
    %c0_i32 = arith.constant 0 : i32
    %c0_i32_0 = arith.constant 0 : i32
    %c0_i32_1 = arith.constant 0 : i32
    return %arg0, %arg1, %c0_i32, %c0_i32_0 : i32, i32, i32, i32
  }
}

</mosaic_0001>

<llo_original>
// kernel: tpu_custom_call.1
$region0: #{tpu_custom_call.1}
  #allocation0 [shape = 'u32[]', space=smem, size = 0x4, offset = 0x4, fixed_abs, tag = 'smem constant byte address 0x4 - core index']
  #allocation1 [shape = 'u32[144,128]{1,0:T(1,128)}', space=vmem, size = 0x12000, scoped, tag = 'internal scratch']
  %s0 = inlined_call_operand.vmem [shape: f32[2,4,256], index: 0, kind: input, shape index: {}]
  %s1 = inlined_call_operand.vmem [shape: f32[2,3,256], index: 1, kind: input, shape index: {}]
  %s2 = inlined_call_operand.vmem [shape: f32[2,1,4,1], index: 2, kind: output, shape index: {0}]
  %s3 = inlined_call_operand.vmem [shape: f32[2,1,4,1], index: 3, kind: output, shape index: {1}]
  %s4 = inlined_call_operand.vmem [shape: f32[2,1,4,1], index: 4, kind: output, shape index: {2}]
  %5 = xla_tuple %s2, %s3, %s4
  %s6 = sld [smem:[#allocation0]]
  $region61: #{tpu_custom_call.1} parent=0
    _
  %s8 = ssub.s32 1, %s6
  %s9 = scalar_select 0, %s8, %s6
  loop: start=0, step=1, limit=4
  $region2: #{tpu_custom_call.1} parent=0 // loop_pre_header
    _
  $region3: #{tpu_custom_call.1} parent=0 // loop_header
    %s11 = sphi 0, %s15
    %p12 = scmp.ge.s32.totalorder %s11, 4
    %s18 = sphi 0, %s37
    %s19 = sphi 0, %s33
    %s20 = sphi 0, %s29
    %s21 = sphi 0, %s18
    %s22 = sphi 0, %s19
    %s23 = sphi 0, %s20
    %s24 = sphi 0, %s21
    %s25 = sphi 0, %s22
    %s26 = sphi 0, %s23
    %s44 = sphi 0, %s46
    %s47 = sphi 0, %s44
    %s48 = sphi 0, %s47
    %s64 = sphi 0, %s48
    %s74 = sphi 0, %s76
    %s77 = sphi 0, %s74
    %s78 = sphi 0, %s77
    %s94 = sphi 0, %s78
    %s102 = sphi 0, %s104
    %s105 = sphi 0, %s102
    %s106 = sphi 0, %s105
    %s122 = sphi 0, %s106
    %s130 = sphi 0, %s132
    %s133 = sphi 0, %s130
    %s134 = sphi 0, %s133
    %s150 = sphi 0, %s134
    %s158 = sphi 0, %s160
    %s161 = sphi 0, %s158
    %s162 = sphi 0, %s161
    %s178 = sphi 0, %s162
  $region4: #{tpu_custom_call.1} parent=0 // loop_header_branch
    %14 = sbr.rel (%p12) target = $region8
  $region5: #{tpu_custom_call.1} parent=0 // loop_body
    %s16 = ssub.s32 %s11, 1
    %s17 = ssub.s32 %s11, 2
    %s27 = sadd.s32 1, %s20
    %p28 = scmp.ge.s32.totalorder %s27, 1
    %s29 = scalar_select %p28, 0, %s27
    %s30 = sadd.s32 1, %s19
    %s31 = scalar_select %p28, %s30, %s19
    %p32 = scmp.ge.s32.totalorder %s31, 1
    %s33 = scalar_select %p32, 0, %s31
    %s34 = sadd.s32 1, %s18
    %s35 = scalar_select %p32, %s34, %s18
    %p36 = scmp.ge.s32.totalorder %s35, 2
    %s37 = scalar_select %p36, 0, %s35
    %s38 = sadd.s32 %s19, %s20
    %s39 = sadd.s32 %s33, %s29
    %s40 = ssub.s32 %s18, %s37
    %s41 = ssub.s32 %s38, %s39
    %s42 = sor.u32 %s40, %s41
    %p43 = scmp.eq.s32.totalorder %s42, 0
    %s45 = sadd.s32 %s44, 1
    %s46 = scalar_select %p43, %s44, %s45
    %p49 = pneg %p43
    %p50 = scmp.eq.s32.totalorder %s11, 1
    %p51 = por %p49, %p50
    %p52 = scmp.ne.s32.totalorder %s44, %s47
    %p53 = scmp.eq.s32.totalorder %s11, 0
    %p54 = por %p52, %p53
    %p55 = scmp.ne.s32.totalorder %s44, %s47
    %p56 = scmp.eq.s32.totalorder %s16, 1
    %p57 = por %p55, %p56
    %p58 = scmp.ne.s32.totalorder %s47, %s48
    %p59 = scmp.eq.s32.totalorder %s16, 0
    %p60 = por %p58, %p59
    %p61 = scmp.ne.s32.totalorder %s47, %s48
    %p62 = scmp.eq.s32.totalorder %s17, 1
    %p63 = por %p61, %p62
    %p65 = scmp.ne.s32.totalorder %s48, %s64
    %p66 = scmp.eq.s32.totalorder %s17, 0
    %p67 = por %p65, %p66
    %s68 = sadd.s32 %s19, %s20
    %s69 = sadd.s32 %s33, %s29
    %s70 = ssub.s32 %s18, %s37
    %s71 = ssub.s32 %s68, %s69
    %s72 = sor.u32 %s70, %s71
    %p73 = scmp.eq.s32.totalorder %s72, 0
    %s75 = sadd.s32 %s74, 1
    %s76 = scalar_select %p73, %s74, %s75
    %p79 = pneg %p73
    %p80 = scmp.eq.s32.totalorder %s11, 1
    %p81 = por %p79, %p80
    %p82 = scmp.ne.s32.totalorder %s74, %s77
    %p83 = scmp.eq.s32.totalorder %s11, 0
    %p84 = por %p82, %p83
    %p85 = scmp.ne.s32.totalorder %s74, %s77
    %p86 = scmp.eq.s32.totalorder %s16, 1
    %p87 = por %p85, %p86
    %p88 = scmp.ne.s32.totalorder %s77, %s78
    %p89 = scmp.eq.s32.totalorder %s16, 0
    %p90 = por %p88, %p89
    %p91 = scmp.ne.s32.totalorder %s77, %s78
    %p92 = scmp.eq.s32.totalorder %s17, 1
    %p93 = por %p91, %p92
    %p95 = scmp.ne.s32.totalorder %s78, %s94
    %p96 = scmp.eq.s32.totalorder %s17, 0
    %p97 = por %p95, %p96
    %s98 = ssub.s32 %s18, %s37
    %s99 = ssub.s32 %s19, %s33
    %s100 = sor.u32 %s98, %s99
    %p101 = scmp.eq.s32.totalorder %s100, 0
    %s103 = sadd.s32 %s102, 1
    %s104 = scalar_select %p101, %s102, %s103
    %p107 = pneg %p101
    %p108 = scmp.eq.s32.totalorder %s11, 1
    %p109 = por %p107, %p108
    %p110 = scmp.ne.s32.totalorder %s102, %s105
    %p111 = scmp.eq.s32.totalorder %s11, 0
    %p112 = por %p110, %p111
    %p113 = scmp.ne.s32.totalorder %s102, %s105
    %p114 = scmp.eq.s32.totalorder %s16, 1
    %p115 = por %p113, %p114
    %p116 = scmp.ne.s32.totalorder %s105, %s106
    %p117 = scmp.eq.s32.totalorder %s16, 0
    %p118 = por %p116, %p117
    %p119 = scmp.ne.s32.totalorder %s105, %s106
    %p120 = scmp.eq.s32.totalorder %s17, 1
    %p121 = por %p119, %p120
    %p123 = scmp.ne.s32.totalorder %s106, %s122
    %p124 = scmp.eq.s32.totalorder %s17, 0
    %p125 = por %p123, %p124
    %s126 = ssub.s32 %s18, %s37
    %s127 = ssub.s32 %s19, %s33
    %s128 = sor.u32 %s126, %s127
    %p129 = scmp.eq.s32.totalorder %s128, 0
    %s131 = sadd.s32 %s130, 1
    %s132 = scalar_select %p129, %s130, %s131
    %p135 = pneg %p129
    %p136 = scmp.eq.s32.totalorder %s11, 1
    %p137 = por %p135, %p136
    %p138 = scmp.ne.s32.totalorder %s130, %s133
    %p139 = scmp.eq.s32.totalorder %s11, 0
    %p140 = por %p138, %p139
    %p141 = scmp.ne.s32.totalorder %s130, %s133
    %p142 = scmp.eq.s32.totalorder %s16, 1
    %p143 = por %p141, %p142
    %p144 = scmp.ne.s32.totalorder %s133, %s134
    %p145 = scmp.eq.s32.totalorder %s16, 0
    %p146 = por %p144, %p145
    %p147 = scmp.ne.s32.totalorder %s133, %s134
    %p148 = scmp.eq.s32.totalorder %s17, 1
    %p149 = por %p147, %p148
    %p151 = scmp.ne.s32.totalorder %s134, %s150
    %p152 = scmp.eq.s32.totalorder %s17, 0
    %p153 = por %p151, %p152
    %s154 = ssub.s32 %s18, %s37
    %s155 = ssub.s32 %s19, %s33
    %s156 = sor.u32 %s154, %s155
    %p157 = scmp.eq.s32.totalorder %s156, 0
    %s159 = sadd.s32 %s158, 1
    %s160 = scalar_select %p157, %s158, %s159
    %p163 = pneg %p157
    %p164 = scmp.eq.s32.totalorder %s11, 1
    %p165 = por %p163, %p164
    %p166 = scmp.ne.s32.totalorder %s158, %s161
    %p167 = scmp.eq.s32.totalorder %s11, 0
    %p168 = por %p166, %p167
    %p169 = scmp.ne.s32.totalorder %s158, %s161
    %p170 = scmp.eq.s32.totalorder %s16, 1
    %p171 = por %p169, %p170
    %p172 = scmp.ne.s32.totalorder %s161, %s162
    %p173 = scmp.eq.s32.totalorder %s16, 0
    %p174 = por %p172, %p173
    %p175 = scmp.ne.s32.totalorder %s161, %s162
    %p176 = scmp.eq.s32.totalorder %s17, 1
    %p177 = por %p175, %p176
    %p179 = scmp.ne.s32.totalorder %s162, %s178
    %p180 = scmp.eq.s32.totalorder %s17, 0
    %p181 = por %p179, %p180
    %p182 = scmp.le.s32.totalorder 1, %s11
    %p183 = scmp.lt.s32.totalorder %s11, 3
    %p184 = pnand %p182, %p183
    %p185 = pneg %p184
    // Predicated region
    $region9: #{tpu_custom_call.1} parent=5 // pred_check
      _
    $region10: #{tpu_custom_call.1} parent=5 // pred_check_branch
      %187 = sbr.rel (%p184) target = $region12
    $region11: #{tpu_custom_call.1} parent=5 // pred_region
      %s188 = ssub.s32 %s11, 1
    $region12: #{tpu_custom_call.1} parent=5 // pred_fallthru
      _
    %p189 = scmp.lt.s32.totalorder %s11, 2
    // Predicated region
    $region13: #{tpu_custom_call.1} parent=5 // pred_check
      %p190 = pneg %p189
    $region14: #{tpu_custom_call.1} parent=5 // pred_check_branch
      %192 = sbr.rel (%p190) target = $region16
    $region15: #{tpu_custom_call.1} parent=5 // pred_region
      // Predicated region
      $region17: #{tpu_custom_call.1} parent=15 // pred_check
        %p193 = pneg %p54
      $region18: #{tpu_custom_call.1} parent=15 // pred_check_branch
        %195 = sbr.rel (%p193) target = $region20
      $region19: #{tpu_custom_call.1} parent=15 // pred_region
        %s196 = sadd.s32 %s19, %s20
        %s197 = smul.u32 2, %s196
        %p198 = scmp.lt.s32.totalorder %s18, 1
        %s199 = scalar_select %p198, %s18, 1
        %p200 = scmp.lt.s32.totalorder %s197, 1
        %s201 = scalar_select %p200, %s197, 1
        %s202 = smul.addr %s199, 2
        %s203 = sadd.s32 %s201, %s202
        %s204 = smul.addr %s203, 4
        %s205 = scalar_lea.vmem %s0, %s204
        %s206 = sadd.s32 %s19, %s20
        %s207 = smul.u32 2, %s206
      $region20: #{tpu_custom_call.1} parent=15 // pred_fallthru
        _
      // Predicated region
      $region21: #{tpu_custom_call.1} parent=15 // pred_check
        %p208 = pneg %p84
      $region22: #{tpu_custom_call.1} parent=15 // pred_check_branch
        %210 = sbr.rel (%p208) target = $region24
      $region23: #{tpu_custom_call.1} parent=15 // pred_region
        %s211 = sadd.s32 %s19, %s20
        %s212 = smul.u32 2, %s211
        %p213 = scmp.lt.s32.totalorder %s18, 1
        %s214 = scalar_select %p213, %s18, 1
        %p215 = scmp.lt.s32.totalorder %s212, 1
        %s216 = scalar_select %p215, %s212, 1
        %s217 = smul.addr %s214, 2
        %s218 = sadd.s32 %s216, %s217
        %s219 = smul.addr %s218, 4
        %s220 = scalar_lea.vmem %s1, %s219
        %s221 = sadd.s32 %s19, %s20
        %s222 = smul.u32 2, %s221
      $region24: #{tpu_custom_call.1} parent=15 // pred_fallthru
        _
    $region16: #{tpu_custom_call.1} parent=5 // pred_fallthru
      _
    %p223 = scmp.le.s32.totalorder 1, %s11
    %p224 = scmp.lt.s32.totalorder %s11, 3
    %p225 = pnand %p223, %p224
    %p226 = pneg %p225
    // Predicated region
    $region25: #{tpu_custom_call.1} parent=5 // pred_check
      _
    $region26: #{tpu_custom_call.1} parent=5 // pred_check_branch
      %228 = sbr.rel (%p225) target = $region28
    $region27: #{tpu_custom_call.1} parent=5 // pred_region
      %s229 = ssub.s32 %s11, 1
      %s230 = sadd.s32 %s22, %s23
      %s231 = smul.u32 2, %s230
      %p232 = scmp.lt.s32.totalorder %s21, 1
      %s233 = scalar_select %p232, %s21, 1
      %p234 = scmp.lt.s32.totalorder %s231, 1
      %s235 = scalar_select %p234, %s231, 1
      %s236 = smul.addr %s233, 2
      %s237 = sadd.s32 %s235, %s236
      %s238 = smul.addr %s237, 4
      %s239 = scalar_lea.vmem %s0, %s238
      %p240 = pneg %p60
      %p241 = pneg %p57
      %s242 = sadd.s32 %s22, %s23
      %s243 = smul.u32 2, %s242
      %p244 = scmp.lt.s32.totalorder %s21, 1
      %s245 = scalar_select %p244, %s21, 1
      %p246 = scmp.lt.s32.totalorder %s243, 1
      %s247 = scalar_select %p246, %s243, 1
      %s248 = smul.addr %s245, 2
      %s249 = sadd.s32 %s247, %s248
      %s250 = smul.addr %s249, 4
      %s251 = scalar_lea.vmem %s1, %s250
      %p252 = pneg %p90
      %p253 = pneg %p87
      %p254 = pneg %p118
      %p255 = pneg %p115
      %p256 = scmp.lt.s32.totalorder %s21, 1
      %s257 = scalar_select %p256, %s21, 1
      %p258 = scmp.lt.s32.totalorder %s22, 0
      %s259 = scalar_select %p258, %s22, 0
      %s260 = sadd.s32 %s259, %s257
      %s261 = smul.addr %s260, 4
      %s262 = scalar_lea.vmem %s2, %s261
      %p263 = pneg %p146
      %p264 = pneg %p143
      %p265 = scmp.lt.s32.totalorder %s21, 1
      %s266 = scalar_select %p265, %s21, 1
      %p267 = scmp.lt.s32.totalorder %s22, 0
      %s268 = scalar_select %p267, %s22, 0
      %s269 = sadd.s32 %s268, %s266
      %s270 = smul.addr %s269, 4
      %s271 = scalar_lea.vmem %s3, %s270
      %p272 = pneg %p174
      %p273 = pneg %p171
      %p274 = scmp.lt.s32.totalorder %s21, 1
      %s275 = scalar_select %p274, %s21, 1
      %p276 = scmp.lt.s32.totalorder %s22, 0
      %s277 = scalar_select %p276, %s22, 0
      %s278 = sadd.s32 %s277, %s275
      %s279 = smul.addr %s278, 4
      %s280 = scalar_lea.vmem %s4, %s279
      %s281 = sadd.s32 %s22, %s23
      %s282 = smul.u32 2, %s281
      %p283 = scmp.lt.s32.totalorder %s21, 1
      %s284 = scalar_select %p283, %s21, 1
      %p285 = scmp.lt.s32.totalorder %s282, 1
      %s286 = scalar_select %p285, %s282, 1
      %s287 = smul.addr %s284, 2
      %s288 = sadd.s32 %s286, %s287
      %s289 = smul.addr %s288, 4
      %s290 = scalar_lea.vmem %s0, %s289
      %s291 = sadd.s32 %s22, %s23
      %s292 = smul.u32 2, %s291
      %s293 = sadd.s32 %s22, %s23
      %s294 = smul.u32 2, %s293
      %p295 = scmp.lt.s32.totalorder %s21, 1
      %s296 = scalar_select %p295, %s21, 1
      %p297 = scmp.lt.s32.totalorder %s294, 1
      %s298 = scalar_select %p297, %s294, 1
      %s299 = smul.addr %s296, 2
      %s300 = sadd.s32 %s298, %s299
      %s301 = smul.addr %s300, 4
      %s302 = scalar_lea.vmem %s1, %s301
      %s303 = sadd.s32 %s22, %s23
      %s304 = smul.u32 2, %s303
      %p305 = scmp.lt.s32.totalorder %s21, 1
      %s306 = scalar_select %p305, %s21, 1
      %p307 = scmp.lt.s32.totalorder %s22, 0
      %s308 = scalar_select %p307, %s22, 0
      %s309 = sadd.s32 %s308, %s306
      %s310 = smul.addr %s309, 4
      %s311 = scalar_lea.vmem %s2, %s310
      %p312 = scmp.lt.s32.totalorder %s21, 1
      %s313 = scalar_select %p312, %s21, 1
      %p314 = scmp.lt.s32.totalorder %s22, 0
      %s315 = scalar_select %p314, %s22, 0
      %s316 = sadd.s32 %s315, %s313
      %s317 = smul.addr %s316, 4
      %s318 = scalar_lea.vmem %s3, %s317
      %p319 = scmp.lt.s32.totalorder %s21, 1
      %s320 = scalar_select %p319, %s21, 1
      %p321 = scmp.lt.s32.totalorder %s22, 0
      %s322 = scalar_select %p321, %s22, 0
      %s323 = sadd.s32 %s322, %s320
      %s324 = smul.addr %s323, 4
      %s325 = scalar_lea.vmem %s4, %s324
      %p326 = scmp.eq.s32.totalorder %s23, 0
      // Predicated region
      $region29: #{tpu_custom_call.1} parent=27 // pred_check
        %p327 = pneg %p326
      $region30: #{tpu_custom_call.1} parent=27 // pred_check_branch
        %329 = sbr.rel (%p327) target = $region32
      $region31: #{tpu_custom_call.1} parent=27 // pred_region
        %vm330 = vcmask 3072
        %331 = vst.msk [vmem:[%s311] sm:$0xf] %vm330, 0.0
        %332 = vst.msk [vmem:[%s318] sm:$0xf] %vm330, 0.0
        %333 = vst.msk [vmem:[%s325] sm:$0xf] %vm330, 0.0
      $region32: #{tpu_custom_call.1} parent=27 // pred_fallthru
        _
      %v334 = vld [vmem:[%s290] sm:$0xff]
      %v335 = vld [vmem:[%s302] sm:$0x77]
      %v337 = vrot.slane %v335, 5
      %v338 = vrot.slane %v337, 4
      %v340 = vadd.f32 %v335, %v338
      %v341 = vrot.slane %v335, 6
      %v342 = vrot.slane %v341, 4
      %v344 = vadd.f32 %v340, %v342
      %vm345 = vcmp.eq.f32.partialorder %v344, 0.0
      %v346 = vrot.slane %v335, 7
      %vm348 = vcmp.gt.f32.partialorder %v335, %v346
      %v349 = vmax.f32 %v335, %v338
      %v351 = vrot.slane %v349, 6
      %vm353 = vcmp.gt.f32.partialorder %v335, %v351
      %v354 = vsel %vm348, 2, 1
      %v355 = vrot.slane %v354, 7
      %v356 = vsel %vm353, 3, %v355
      %v357 = vrot.slane %v356, 6
      %v358 = vrot.slane %v357, 4
      %v359 = vsel %vm345, 0, %v358
      %v360 = vlaneseq
      %v361 = vshrl.u32 %v360, 7
      %v362 = vlaneseq
      %v363 = vshrl.u32 %v362, 7
      %v364 = vsub.s32 0, %v363
      %v365 = vrot.slane %v359, %v364
      %v366 = vlaneseq
      %v367 = vshrl.u32 %v366, 7
      %v368 = vsub.s32 4, %v367
      %v369 = vrot.slane %v359, %v368
      %v370 = vlaneseq
      %v371 = vshrl.u32 %v370, 7
      %v372 = vsub.s32 0, %v371
      %v373 = vrot.slane %v365, %v372
      %v374 = vlaneseq
      %v375 = vshrl.u32 %v374, 7
      %v376 = vsub.s32 0, %v375
      %v377 = vrot.slane %v369, %v376
      %vm378 = vcmp.eq.s32.totalorder %v361, %v373
      %vm379 = vcmp.eq.s32.totalorder %v361, %v377
      %v380 = vsel %vm378, 1, 0
      %v381 = vsel %vm379, 1, 0
      %v382 = vcvt.s32.f32 %v380
      %v383 = vcvt.s32.f32 %v381
      %v386 = vcombine.low %v382, %v383
      %v388 = vmul.f32 %v334, %v386
      %v389 = vmul.f32 %v334, %v334
      %v390 = vadd.f32 %v389, %v386
      %v391 = vsub.f32 1.0, %v334
      %v393 = vcombine.high %v334, %v334
      %v396 = vcombine.high %v391, %v391
      %v398 = vsel %vm378, %v334, %v391
      %v399 = vsel %vm379, %v393, %v396
      %v400 = vlog2.pop %v398
      %v401 = vmul.f32 %v400, 0.6931472
      %v402 = vlog2.pop %v399
      %v403 = vmul.f32 %v402, 0.6931472
      %v404 = vmax.f32 %v401, -100.0
      %v405 = vmax.f32 %v403, -100.0
      %v406 = vld [vmem:[%s311] sm:$0xf]
      %v408 = vcombine.high %v388, %v388
      %vm410 = vcmask 1043456
      %v411 = vsel %vm410, %v388, 0.0
      %v412 = vsel %vm410, %v408, 0.0
      %v413 = vadd.f32 %v411, %v412
      %414 = vadd.xlane.f32.xlu0 %v413
      %v415 = vpop.xlane.xlu0 %414
      %v416 = vadd.f32 %v406, %v415
      %vm417 = vcmask 3072
      %418 = vst.msk [vmem:[%s311] sm:$0xf] %vm417, %v416
      %v419 = vld [vmem:[%s318] sm:$0xf]
      %v421 = vcombine.high %v390, %v390
      %v423 = vsel %vm410, %v390, 0.0
      %v424 = vsel %vm410, %v421, 0.0
      %v425 = vadd.f32 %v423, %v424
      %426 = vadd.xlane.f32.xlu0 %v425
      %v427 = vpop.xlane.xlu0 %426
      %v428 = vadd.f32 %v419, %v427
      %429 = vst.msk [vmem:[%s318] sm:$0xf] %vm417, %v428
      %v430 = vld [vmem:[%s325] sm:$0xf]
      %v431 = vsel %vm410, %v404, 0.0
      %v432 = vsel %vm410, %v405, 0.0
      %v433 = vadd.f32 %v431, %v432
      %434 = vadd.xlane.f32.xlu0 %v433
      %v435 = vpop.xlane.xlu0 %434
      %v436 = vadd.f32 %v430, %v435
      %437 = vst.msk [vmem:[%s325] sm:$0xf] %vm417, %v436
      %p438 = scmp.lt.s32.totalorder %s21, 1
      %s439 = scalar_select %p438, %s21, 1
      %p440 = scmp.lt.s32.totalorder %s22, 0
      %s441 = scalar_select %p440, %s22, 0
      %s442 = sadd.s32 %s441, %s439
      %s443 = smul.addr %s442, 4
      %s444 = scalar_lea.vmem %s2, %s443
      %p445 = scmp.lt.s32.totalorder %s21, 1
      %s446 = scalar_select %p445, %s21, 1
      %p447 = scmp.lt.s32.totalorder %s22, 0
      %s448 = scalar_select %p447, %s22, 0
      %s449 = sadd.s32 %s448, %s446
      %s450 = smul.addr %s449, 4
      %s451 = scalar_lea.vmem %s3, %s450
      %p452 = scmp.lt.s32.totalorder %s21, 1
      %s453 = scalar_select %p452, %s21, 1
      %p454 = scmp.lt.s32.totalorder %s22, 0
      %s455 = scalar_select %p454, %s22, 0
      %s456 = sadd.s32 %s455, %s453
      %s457 = smul.addr %s456, 4
      %s458 = scalar_lea.vmem %s4, %s457
      // Predicated region
      $region33: #{tpu_custom_call.1} parent=27 // pred_check
        %p459 = pneg %p115
      $region34: #{tpu_custom_call.1} parent=27 // pred_check_branch
        %461 = sbr.rel (%p459) target = $region36
      $region35: #{tpu_custom_call.1} parent=27 // pred_region
        _
      $region36: #{tpu_custom_call.1} parent=27 // pred_fallthru
        _
      // Predicated region
      $region37: #{tpu_custom_call.1} parent=27 // pred_check
        %p462 = pneg %p143
      $region38: #{tpu_custom_call.1} parent=27 // pred_check_branch
        %464 = sbr.rel (%p462) target = $region40
      $region39: #{tpu_custom_call.1} parent=27 // pred_region
        _
      $region40: #{tpu_custom_call.1} parent=27 // pred_fallthru
        _
      // Predicated region
      $region41: #{tpu_custom_call.1} parent=27 // pred_check
        %p465 = pneg %p171
      $region42: #{tpu_custom_call.1} parent=27 // pred_check_branch
        %467 = sbr.rel (%p465) target = $region44
      $region43: #{tpu_custom_call.1} parent=27 // pred_region
        _
      $region44: #{tpu_custom_call.1} parent=27 // pred_fallthru
        _
    $region28: #{tpu_custom_call.1} parent=5 // pred_fallthru
      _
    %p468 = scmp.le.s32.totalorder 2, %s11
    // Predicated region
    $region45: #{tpu_custom_call.1} parent=5 // pred_check
      %p469 = pneg %p468
    $region46: #{tpu_custom_call.1} parent=5 // pred_check_branch
      %471 = sbr.rel (%p469) target = $region48
    $region47: #{tpu_custom_call.1} parent=5 // pred_region
      %s472 = ssub.s32 %s11, 2
      // Predicated region
      $region49: #{tpu_custom_call.1} parent=47 // pred_check
        %p473 = pneg %p121
      $region50: #{tpu_custom_call.1} parent=47 // pred_check_branch
        %475 = sbr.rel (%p473) target = $region52
      $region51: #{tpu_custom_call.1} parent=47 // pred_region
        %p476 = scmp.lt.s32.totalorder %s24, 1
        %s477 = scalar_select %p476, %s24, 1
        %p478 = scmp.lt.s32.totalorder %s25, 0
        %s479 = scalar_select %p478, %s25, 0
        %s480 = sadd.s32 %s479, %s477
        %s481 = smul.addr %s480, 4
        %s482 = scalar_lea.vmem %s2, %s481
      $region52: #{tpu_custom_call.1} parent=47 // pred_fallthru
        _
      // Predicated region
      $region53: #{tpu_custom_call.1} parent=47 // pred_check
        %p483 = pneg %p149
      $region54: #{tpu_custom_call.1} parent=47 // pred_check_branch
        %485 = sbr.rel (%p483) target = $region56
      $region55: #{tpu_custom_call.1} parent=47 // pred_region
        %p486 = scmp.lt.s32.totalorder %s24, 1
        %s487 = scalar_select %p486, %s24, 1
        %p488 = scmp.lt.s32.totalorder %s25, 0
        %s489 = scalar_select %p488, %s25, 0
        %s490 = sadd.s32 %s489, %s487
        %s491 = smul.addr %s490, 4
        %s492 = scalar_lea.vmem %s3, %s491
      $region56: #{tpu_custom_call.1} parent=47 // pred_fallthru
        _
      // Predicated region
      $region57: #{tpu_custom_call.1} parent=47 // pred_check
        %p493 = pneg %p177
      $region58: #{tpu_custom_call.1} parent=47 // pred_check_branch
        %495 = sbr.rel (%p493) target = $region60
      $region59: #{tpu_custom_call.1} parent=47 // pred_region
        %p496 = scmp.lt.s32.totalorder %s24, 1
        %s497 = scalar_select %p496, %s24, 1
        %p498 = scmp.lt.s32.totalorder %s25, 0
        %s499 = scalar_select %p498, %s25, 0
        %s500 = sadd.s32 %s499, %s497
        %s501 = smul.addr %s500, 4
        %s502 = scalar_lea.vmem %s4, %s501
      $region60: #{tpu_custom_call.1} parent=47 // pred_fallthru
        _
    $region48: #{tpu_custom_call.1} parent=5 // pred_fallthru
      _
  $region6: #{tpu_custom_call.1} parent=0 // loop_footer
    %s15 = sadd.s32 1, %s11
  $region7: #{tpu_custom_call.1} parent=0 // loop_footer_branch
    %10 = sbr.rel target = $region3
  $region8: #{tpu_custom_call.1} parent=0 // loop_exit
    _

</llo_original>
